<compile_context>
chip_gen: v5e
topology: v5e:2x2
jax: 0.10.0
libtpu: 0.0.40
codegen_flags: <defaults>
</compile_context>

<pallas_src>
import jax
import jax.numpy as jnp
import numpy as np
from jax import lax
from jax.experimental import pallas as pl
from jax.experimental.pallas import tpu as pltpu


# ---------------------------------------------------------------------------
# Pallas kernels
# ---------------------------------------------------------------------------

def _pw_bn_relu_kernel(x_ref, w_ref, b_ref, o_ref):
    """1x1x1 conv (matmul over flattened voxels) + folded-BN bias + ReLU."""
    x = x_ref[...].astype(w_ref.dtype)           # bf16 cast in VMEM (free-ish)
    acc = jnp.dot(x, w_ref[...], preferred_element_type=jnp.float32)
    o_ref[...] = jnp.maximum(acc + b_ref[...], 0.0).astype(o_ref.dtype)


def _fused_conv2_conv3_kernel(xm1_ref, x0_ref, xp1_ref, w2_ref, b2_ref,
                              w3_ref, b3_ref, res_ref, o_ref,
                              xpad_ref, win_ref, acc_ref):
    """One (n, d) output slice of:
         conv2 (3x3x3, pad=1) + bn2 + relu + conv3 (1x1x1) + bn3 + res + relu.

    xm1/x0/xp1 : (H, W, Cp) bf16 D-slices of conv2's input at d-1, d, d+1
                 (d-1 / d+1 are clamped by the index_map; masked via pl.when).
    w2_ref     : (9, 3*Cp, Cp) taps, row = kd*3+kh, K index = kw*Cp + ci.
    res_ref    : (H, W, Co) f32 residual slice of the block input x.
    o_ref      : (H, W, Co) block output.
    xpad/win/acc : VMEM scratch (halo slab, merged-kw window, f32 accumulator).
    """
    H, W, Cp = x0_ref.shape
    Co = o_ref.shape[-1]
    d = pl.program_id(1)
    nd = pl.num_programs(1)

    # Build the zero-padded (3, H+2, W+2, Cp) halo slab in VMEM — no HBM pad.
    xpad_ref[...] = jnp.zeros_like(xpad_ref)
    xpad_ref[1, 1:H + 1, 1:W + 1, :] = x0_ref[...]

    @pl.when(d > 0)
    def _():
        xpad_ref[0, 1:H + 1, 1:W + 1, :] = xm1_ref[...]

    @pl.when(d < nd - 1)
    def _():
        xpad_ref[2, 1:H + 1, 1:W + 1, :] = xp1_ref[...]

    # 3x3x3 conv as 9 MXU matmuls with K = 3*Cp (kw taps merged into K).
    # (On v6e/v7x the 256-deep MXU prefers the deeper K; v5e still fine.)
    acc_ref[...] = jnp.zeros_like(acc_ref)
    for kd in range(3):
        for kh in range(3):
            for kw in range(3):
                win_ref[:, :, kw * Cp:(kw + 1) * Cp] = \
                    xpad_ref[kd, kh:kh + H, kw:kw + W, :]
            acc_ref[...] += jnp.dot(
                win_ref[...].reshape(H * W, 3 * Cp),
                w2_ref[kd * 3 + kh],
                preferred_element_type=jnp.float32)

    # bn2 bias + relu, cast to bf16, then conv3 + bn3 bias + residual + relu.
    h = jnp.maximum(acc_ref[...] + b2_ref[...], 0.0).astype(w3_ref.dtype)
    out = jnp.dot(h, w3_ref[...], preferred_element_type=jnp.float32)
    out = out + b3_ref[...] + res_ref[...].reshape(H * W, Co).astype(jnp.float32)
    o_ref[...] = jnp.maximum(out, 0.0).reshape(H, W, Co).astype(o_ref.dtype)


# ---------------------------------------------------------------------------
# Wrappers (pallas_call plumbing)
# ---------------------------------------------------------------------------

def pointwise_conv_bn_relu(x2d, w, bias, out_dtype, tm=512):
    """x2d: (M, Cin) flattened voxels; w: (Cin, Cout) bf16; bias: (Cout,) f32."""
    M, K = x2d.shape
    Co = w.shape[1]
    Mp = pl.cdiv(M, tm) * tm
    if Mp != M:                          # pad ragged last tile (sliced off below)
        x2d = jnp.pad(x2d, ((0, Mp - M), (0, 0)))
    out = pl.pallas_call(
        _pw_bn_relu_kernel,
        out_shape=jax.ShapeDtypeStruct((Mp, Co), out_dtype),
        grid_spec=pltpu.PrefetchScalarGridSpec(
            num_scalar_prefetch=0,
            grid=(Mp // tm,),
            in_specs=[
                pl.BlockSpec((tm, K), lambda i: (i, 0)),
                pl.BlockSpec((K, Co), lambda i: (0, 0)),
                pl.BlockSpec((1, Co), lambda i: (0, 0)),
            ],
            out_specs=pl.BlockSpec((tm, Co), lambda i: (i, 0))),
        compiler_params=pltpu.CompilerParams(
            dimension_semantics=("parallel",)),
    )(x2d, w, bias.reshape(1, Co))
    return out[:M] if Mp != M else out


def fused_conv2_conv3(o1_5d, x_5d, w2m, b2, w3, b3, out_dtype):
    """o1_5d: (N, D, H, W, Cp) bf16; x_5d: (N, D, H, W, Co) residual input."""
    N, D, H, W, Cp = o1_5d.shape
    Co = w3.shape[1]

    def idx_prev(n, d):
        return (n, jnp.maximum(d - 1, 0), 0, 0, 0)

    def idx_curr(n, d):
        return (n, d, 0, 0, 0)

    def idx_next(n, d):
        return (n, jnp.minimum(d + 1, D - 1), 0, 0, 0)

    return pl.pallas_call(
        _fused_conv2_conv3_kernel,
        out_shape=jax.ShapeDtypeStruct((N, D, H, W, Co), out_dtype),
        grid_spec=pltpu.PrefetchScalarGridSpec(
            num_scalar_prefetch=0,
            grid=(N, D),
            in_specs=[
                pl.BlockSpec((None, None, H, W, Cp), idx_prev),
                pl.BlockSpec((None, None, H, W, Cp), idx_curr),
                pl.BlockSpec((None, None, H, W, Cp), idx_next),
                pl.BlockSpec((9, 3 * Cp, Cp), lambda n, d: (0, 0, 0)),
                pl.BlockSpec((1, Cp), lambda n, d: (0, 0)),
                pl.BlockSpec((Cp, Co), lambda n, d: (0, 0)),
                pl.BlockSpec((1, Co), lambda n, d: (0, 0)),
                pl.BlockSpec((None, None, H, W, Co), idx_curr),
            ],
            out_specs=pl.BlockSpec((None, None, H, W, Co), idx_curr),
            scratch_shapes=[
                pltpu.VMEM((3, H + 2, W + 2, Cp), o1_5d.dtype),   # halo slab
                pltpu.VMEM((H, W, 3 * Cp), o1_5d.dtype),          # merged-kw win
                pltpu.VMEM((H * W, Cp), jnp.float32),             # conv2 acc
            ]),
        compiler_params=pltpu.CompilerParams(
            dimension_semantics=("parallel", "parallel")),
    )(o1_5d, o1_5d, o1_5d, w2m, b2.reshape(1, Cp), w3, b3.reshape(1, Co), x_5d)


# ---------------------------------------------------------------------------
# Parameter prep (BN folding, bf16 cast, lane padding)
# ---------------------------------------------------------------------------

def _fold_bn(bn, eps=1e-5):
    gamma, beta, mean, var = bn
    s = gamma / jnp.sqrt(var + eps)
    return s, beta - mean * s


def _round_up(v, m):
    return (v + m - 1) // m * m


def _prepare_params(params, lane=128):
    """Fold BN scale into weights, pad 'planes' channels to a lane multiple."""
    Ci, P = params['w1'].shape
    Co = params['w3'].shape[1]
    Pp = _round_up(P, lane)

    s1, b1 = _fold_bn(params['bn1'])
    s2, b2 = _fold_bn(params['bn2'])
    s3, b3 = _fold_bn(params['bn3'])

    w1 = params['w1'] * s1[None, :]                               # (Ci, P)
    w1 = jnp.pad(w1, ((0, 0), (0, Pp - P))).astype(jnp.bfloat16)  # (Ci, Pp)
    b1 = jnp.pad(b1, (0, Pp - P)).astype(jnp.float32)

    w2 = params['w2'] * s2[None, None, None, None, :]             # (3,3,3,P,P)
    w2 = jnp.pad(w2, ((0, 0), (0, 0), (0, 0), (0, Pp - P), (0, Pp - P)))
    w2m = w2.reshape(9, 3 * Pp, Pp).astype(jnp.bfloat16)          # kw merged in K
    b2 = jnp.pad(b2, (0, Pp - P)).astype(jnp.float32)

    w3 = params['w3'] * s3[None, :]                               # (P, Co)
    w3 = jnp.pad(w3, ((0, Pp - P), (0, 0))).astype(jnp.bfloat16)  # (Pp, Co)
    b3 = b3.astype(jnp.float32)

    return dict(w1=w1, b1=b1, w2m=w2m, b2=b2, w3=w3, b3=b3, Pp=Pp)


def bottleneck_forward(x_ncdhw, params):
    """Bottleneck.forward (stride=1, downsample=None). Input is NCDHW."""
    x = jnp.transpose(x_ncdhw, (0, 2, 3, 4, 1))  # -> NDHWC
    N, D, H, W, Cin = x.shape
    out_c = params['w3'].shape[1]
    assert Cin == out_c, "downsample=None requires inplanes == planes*expansion"

    prep = _prepare_params(params)
    Pp = prep['Pp']

    # conv1 (1x1x1) + bn1 + relu -> bf16, lane-padded planes
    M = N * D * H * W
    o1 = pointwise_conv_bn_relu(x.reshape(M, Cin), prep['w1'], prep['b1'],
                                jnp.bfloat16)
    o1_5d = o1.reshape(N, D, H, W, Pp)

    # conv2 + bn2 + relu + conv3 + bn3 + residual + relu, fused, tiled on (N,D)
    out = fused_conv2_conv3(o1_5d, x, prep['w2m'], prep['b2'],
                            prep['w3'], prep['b3'], x.dtype)
    return jnp.transpose(out, (0, 4, 1, 2, 3))  # back to NCDHW


# ---------------------------------------------------------------------------
# Pure-JAX reference (same BN-fold / bf16 quantization points)
# ---------------------------------------------------------------------------

def reference_forward(x_ncdhw, params):
    x = jnp.transpose(x_ncdhw, (0, 2, 3, 4, 1))
    Ci, P = params['w1'].shape
    Co = params['w3'].shape[1]
    s1, b1 = _fold_bn(params['bn1'])
    s2, b2 = _fold_bn(params['bn2'])
    s3, b3 = _fold_bn(params['bn3'])
    w1 = (params['w1'] * s1[None, :]).astype(jnp.bfloat16)
    w2 = (params['w2'] * s2).astype(jnp.bfloat16)
    w3 = (params['w3'] * s3[None, :]).astype(jnp.bfloat16)

    def conv(y, w, pad):
        return lax.conv_general_dilated(
            y, w, window_strides=(1, 1, 1), padding=pad,
            dimension_numbers=('NDHWC', 'DHWIO', 'NDHWC'),
            preferred_element_type=jnp.float32)

    o = conv(x.astype(jnp.bfloat16), w1.reshape(1, 1, 1, Ci, P), [(0, 0)] * 3)
    o = jnp.maximum(o + b1, 0.0).astype(jnp.bfloat16)
    o = conv(o, w2, [(1, 1)] * 3)
    o = jnp.maximum(o + b2, 0.0).astype(jnp.bfloat16)
    o = conv(o, w3.reshape(1, 1, 1, P, Co), [(0, 0)] * 3)
    o = jnp.maximum(o + b3 + x, 0.0)
    return jnp.transpose(o, (0, 4, 1, 2, 3))


# ---------------------------------------------------------------------------
# Main
# ---------------------------------------------------------------------------

if __name__ == "__main__":
    key = jax.random.PRNGKey(0)
    N, D, H, W = 2, 4, 16, 16
    planes = 4
    inplanes = planes * 4  # expansion = 4 (so residual add is shape-valid)
    ks = jax.random.split(key, 8)

    x = jax.random.normal(ks[0], (N, inplanes, D, H, W), jnp.float32)

    def bn_params(k, c):
        k1, k2, k3, k4 = jax.random.split(k, 4)
        gamma = 1.0 + 0.1 * jax.random.normal(k1, (c,), jnp.float32)
        beta = 0.1 * jax.random.normal(k2, (c,), jnp.float32)
        mean = 0.05 * jax.random.normal(k3, (c,), jnp.float32)
        var = 1.0 + 0.1 * jax.random.uniform(k4, (c,), jnp.float32)
        return (gamma, beta, mean, var)

    params = {
        # conv weights stored directly in DHWIO / (Cin, Cout) layout
        'w1': 0.2 * jax.random.normal(ks[1], (inplanes, planes), jnp.float32),
        'w2': 0.2 * jax.random.normal(ks[2], (3, 3, 3, planes, planes),
                                      jnp.float32),
        'w3': 0.2 * jax.random.normal(ks[3], (planes, planes * 4), jnp.float32),
        'bn1': bn_params(ks[4], planes),
        'bn2': bn_params(ks[5], planes),
        'bn3': bn_params(ks[6], planes * 4),
    }

    out = jax.block_until_ready(bottleneck_forward(x, params))
    ref = jax.block_until_ready(reference_forward(x, params))
    np.testing.assert_allclose(np.asarray(out, dtype=np.float32),
                               np.asarray(ref, dtype=np.float32),
                               rtol=5e-2, atol=5e-2)
    print("KERNEL_OK")
</pallas_src>

<mosaic_0001>
module attributes {stable_mosaic.version = 11 : i64} {
  func.func @_pw_bn_relu_kernel(%arg0: i32, %arg1: memref<512x16xf32, #tpu.memory_space<vmem>>, %arg2: memref<16x128xbf16, #tpu.memory_space<vmem>>, %arg3: memref<1x128xf32, #tpu.memory_space<vmem>>, %arg4: memref<512x128xbf16, #tpu.memory_space<vmem>>) attributes {dimension_semantics = [#tpu.dimension_semantics<parallel>], iteration_bounds = array<i64: 4>, scalar_prefetch = 0 : i64, scratch_operands = 0 : i64, tpu.core_type = #tpu.core_type<tc>, window_params = [{transform_indices = @transform_0, window_bounds = array<i64: 512, 16>}, {pipeline_mode = #tpu.pipeline_mode<synchronous>, transform_indices = @transform_1, window_bounds = array<i64: 16, 128>}, {pipeline_mode = #tpu.pipeline_mode<synchronous>, transform_indices = @transform_2, window_bounds = array<i64: 1, 128>}, {transform_indices = @transform_3, window_bounds = array<i64: 512, 128>}]} {
    %c0 = arith.constant 0 : index
    %c0_0 = arith.constant 0 : index
    %0 = vector.load %arg1[%c0, %c0_0] : memref<512x16xf32, #tpu.memory_space<vmem>>, vector<512x16xf32>
    %1 = arith.truncf %0 : vector<512x16xf32> to vector<512x16xbf16>
    %c0_1 = arith.constant 0 : index
    %c0_2 = arith.constant 0 : index
    %2 = vector.load %arg2[%c0_1, %c0_2] : memref<16x128xbf16, #tpu.memory_space<vmem>>, vector<16x128xbf16>
    %cst = arith.constant dense<0.000000e+00> : vector<512x128xf32>
    %3 = tpu.matmul %1, %2, %cst {dimension_numbers = #tpu.dot_dimension_numbers<[1], [0], [0], [1], [0, 0, 1, 1], [], []>} : vector<512x16xbf16>, vector<16x128xbf16>, vector<512x128xf32> -> vector<512x128xf32>
    %c0_3 = arith.constant 0 : index
    %c0_4 = arith.constant 0 : index
    %4 = vector.load %arg3[%c0_3, %c0_4] : memref<1x128xf32, #tpu.memory_space<vmem>>, vector<1x128xf32>
    %5 = vector.broadcast %4 : vector<1x128xf32> to vector<512x128xf32>
    %6 = arith.addf %3, %5 : vector<512x128xf32>
    %cst_5 = arith.constant 0.000000e+00 : f32
    %7 = vector.broadcast %cst_5 : f32 to vector<512x128xf32>
    %8 = arith.maximumf %6, %7 : vector<512x128xf32>
    %9 = arith.truncf %8 : vector<512x128xf32> to vector<512x128xbf16>
    %c0_6 = arith.constant 0 : index
    %c0_7 = arith.constant 0 : index
    %10 = vector.load %arg4[%c0_6, %c0_7] : memref<512x128xbf16, #tpu.memory_space<vmem>>, vector<512x128xbf16>
    tpu.vector_store %arg4[%c0_6, %c0_7], %9 {strides = array<i32>} : memref<512x128xbf16, #tpu.memory_space<vmem>>, vector<512x128xbf16>,
    return
  }
  func.func @transform_0(%arg0: i32) -> (i32, i32) {
    %c0_i32 = arith.constant 0 : i32
    %c0_i32_0 = arith.constant 0 : i32
    return %arg0, %c0_i32 : i32, i32
  }
  func.func @transform_1(%arg0: i32) -> (i32, i32) {
    %c0_i32 = arith.constant 0 : i32
    %c0_i32_0 = arith.constant 0 : i32
    %c0_i32_1 = arith.constant 0 : i32
    return %c0_i32, %c0_i32_0 : i32, i32
  }
  func.func @transform_2(%arg0: i32) -> (i32, i32) {
    %c0_i32 = arith.constant 0 : i32
    %c0_i32_0 = arith.constant 0 : i32
    %c0_i32_1 = arith.constant 0 : i32
    return %c0_i32, %c0_i32_0 : i32, i32
  }
  func.func @transform_3(%arg0: i32) -> (i32, i32) {
    %c0_i32 = arith.constant 0 : i32
    %c0_i32_0 = arith.constant 0 : i32
    return %arg0, %c0_i32 : i32, i32
  }
}

</mosaic_0001>

<llo_original>
// kernel: tpu_custom_call.1
$region0: #{tpu_custom_call.1}
  #allocation0 [shape = 'u32[]', space=smem, size = 0x4, offset = 0x4, fixed_abs, tag = 'smem constant byte address 0x4 - core index']
  #allocation1 [shape = 'u32[72,128]{1,0:T(1,128)}', space=vmem, size = 0x9000, scoped, tag = 'internal scratch']
  %s0 = inlined_call_operand.vmem [shape: f32[2048,16], index: 0, kind: input, shape index: {}]
  %s1 = inlined_call_operand.vmem [shape: bf16[16,128], index: 1, kind: input, shape index: {}]
  %s2 = inlined_call_operand.vmem [shape: f32[1,128], index: 2, kind: input, shape index: {}]
  %s3 = inlined_call_operand.hbm [shape: bf16[2048,128], index: 3, kind: output, shape index: {}]
  %s4 = sld [smem:[#allocation0]]
  $region45: #{tpu_custom_call.1} parent=0
    _
  %s6 = ssub.s32 1, %s4
  %s7 = scalar_select 0, %s6, %s4
  $region1: #{tpu_custom_call.1} parent=0
    #allocation2 [shape = 'u8[262144]{0}', space=vmem, size = 0x40000, scoped, tag = 'output window, operand 0']
    #allocation3 [shape = 's32[2]{0}', space=sflag, size = 0x8, scoped, tag = 'scoped memory for tpu_custom_call.1']
    %8 = vsyncpa [#allocation3], 0
    %s9 = scalar_lea.sflag [#allocation3], 1
    %10 = vsyncpa %s9, 0
    loop: start=0, step=1, limit=6
    $region2: #{tpu_custom_call.1} parent=1 // loop_pre_header
      _
    $region3: #{tpu_custom_call.1} parent=1 // loop_header
      %s12 = sphi 0, %s16
      %p13 = scmp.ge.s32.totalorder %s12, 6
      %s22 = sphi 0, %s24
      %s25 = sphi 0, %s22
      %s26 = sphi 0, %s25
      %s42 = sphi 0, %s26
      %s46 = sphi 0, %s46
      %s48 = sphi 0, %s46
      %s49 = sphi 0, %s48
      %s63 = sphi 0, %s49
      %s67 = sphi 0, %s67
      %s69 = sphi 0, %s67
      %s70 = sphi 0, %s69
      %s84 = sphi 0, %s70
      %s90 = sphi 0, %s92
      %s93 = sphi 0, %s90
      %s94 = sphi 0, %s93
      %s110 = sphi 0, %s94
    $region4: #{tpu_custom_call.1} parent=1 // loop_header_branch
      %15 = sbr.rel (%p13) target = $region8
    $region5: #{tpu_custom_call.1} parent=1 // loop_body
      %s17 = ssub.s32 %s12, 1
      %s18 = ssub.s32 %s12, 2
      %s19 = sadd.s32 %s12, 1
      %s20 = ssub.s32 %s12, %s19
      %p21 = scmp.eq.s32.totalorder %s20, 0
      %s23 = sadd.s32 %s22, 1
      %s24 = scalar_select %p21, %s22, %s23
      %p27 = pneg %p21
      %p28 = scmp.eq.s32.totalorder %s12, 3
      %p29 = por %p27, %p28
      %p30 = scmp.ne.s32.totalorder %s22, %s25
      %p31 = scmp.eq.s32.totalorder %s12, 0
      %p32 = por %p30, %p31
      %p33 = scmp.ne.s32.totalorder %s22, %s25
      %p34 = scmp.eq.s32.totalorder %s17, 3
      %p35 = por %p33, %p34
      %p36 = scmp.ne.s32.totalorder %s25, %s26
      %p37 = scmp.eq.s32.totalorder %s17, 0
      %p38 = por %p36, %p37
      %p39 = scmp.ne.s32.totalorder %s25, %s26
      %p40 = scmp.eq.s32.totalorder %s18, 3
      %p41 = por %p39, %p40
      %p43 = scmp.ne.s32.totalorder %s26, %s42
      %p44 = scmp.eq.s32.totalorder %s18, 0
      %p45 = por %p43, %p44
      %s47 = sadd.s32 %s46, 1
      %p50 = scmp.eq.s32.totalorder %s12, 3
      %p51 = scmp.ne.s32.totalorder %s46, %s48
      %p52 = scmp.eq.s32.totalorder %s12, 0
      %p53 = por %p51, %p52
      %p54 = scmp.ne.s32.totalorder %s46, %s48
      %p55 = scmp.eq.s32.totalorder %s17, 3
      %p56 = por %p54, %p55
      %p57 = scmp.ne.s32.totalorder %s48, %s49
      %p58 = scmp.eq.s32.totalorder %s17, 0
      %p59 = por %p57, %p58
      %p60 = scmp.ne.s32.totalorder %s48, %s49
      %p61 = scmp.eq.s32.totalorder %s18, 3
      %p62 = por %p60, %p61
      %p64 = scmp.ne.s32.totalorder %s49, %s63
      %p65 = scmp.eq.s32.totalorder %s18, 0
      %p66 = por %p64, %p65
      %s68 = sadd.s32 %s67, 1
      %p71 = scmp.eq.s32.totalorder %s12, 3
      %p72 = scmp.ne.s32.totalorder %s67, %s69
      %p73 = scmp.eq.s32.totalorder %s12, 0
      %p74 = por %p72, %p73
      %p75 = scmp.ne.s32.totalorder %s67, %s69
      %p76 = scmp.eq.s32.totalorder %s17, 3
      %p77 = por %p75, %p76
      %p78 = scmp.ne.s32.totalorder %s69, %s70
      %p79 = scmp.eq.s32.totalorder %s17, 0
      %p80 = por %p78, %p79
      %p81 = scmp.ne.s32.totalorder %s69, %s70
      %p82 = scmp.eq.s32.totalorder %s18, 3
      %p83 = por %p81, %p82
      %p85 = scmp.ne.s32.totalorder %s70, %s84
      %p86 = scmp.eq.s32.totalorder %s18, 0
      %p87 = por %p85, %p86
      %s88 = ssub.s32 %s12, %s19
      %p89 = scmp.eq.s32.totalorder %s88, 0
      %s91 = sadd.s32 %s90, 1
      %s92 = scalar_select %p89, %s90, %s91
      %p95 = pneg %p89
      %p96 = scmp.eq.s32.totalorder %s12, 3
      %p97 = por %p95, %p96
      %p98 = scmp.ne.s32.totalorder %s90, %s93
      %p99 = scmp.eq.s32.totalorder %s12, 0
      %p100 = por %p98, %p99
      %p101 = scmp.ne.s32.totalorder %s90, %s93
      %p102 = scmp.eq.s32.totalorder %s17, 3
      %p103 = por %p101, %p102
      %p104 = scmp.ne.s32.totalorder %s93, %s94
      %p105 = scmp.eq.s32.totalorder %s17, 0
      %p106 = por %p104, %p105
      %p107 = scmp.ne.s32.totalorder %s93, %s94
      %p108 = scmp.eq.s32.totalorder %s18, 3
      %p109 = por %p107, %p108
      %p111 = scmp.ne.s32.totalorder %s94, %s110
      %p112 = scmp.eq.s32.totalorder %s18, 0
      %p113 = por %p111, %p112
      %p114 = scmp.le.s32.totalorder 1, %s12
      %p115 = scmp.lt.s32.totalorder %s12, 5
      %p116 = pnand %p114, %p115
      %p117 = pneg %p116
      // Predicated region
      $region9: #{tpu_custom_call.1} parent=5 // pred_check
        _
      $region10: #{tpu_custom_call.1} parent=5 // pred_check_branch
        %119 = sbr.rel (%p116) target = $region12
      $region11: #{tpu_custom_call.1} parent=5 // pred_region
        %s120 = ssub.s32 %s12, 1
        // Predicated region
        $region13: #{tpu_custom_call.1} parent=11 // pred_check
          %p121 = pneg %p59
        $region14: #{tpu_custom_call.1} parent=11 // pred_check_branch
          %123 = sbr.rel (%p121) target = $region16
        $region15: #{tpu_custom_call.1} parent=11 // pred_region
          _
        $region16: #{tpu_custom_call.1} parent=11 // pred_fallthru
          _
        // Predicated region
        $region17: #{tpu_custom_call.1} parent=11 // pred_check
          %p124 = pneg %p80
        $region18: #{tpu_custom_call.1} parent=11 // pred_check_branch
          %126 = sbr.rel (%p124) target = $region20
        $region19: #{tpu_custom_call.1} parent=11 // pred_region
          _
        $region20: #{tpu_custom_call.1} parent=11 // pred_fallthru
          _
      $region12: #{tpu_custom_call.1} parent=5 // pred_fallthru
        _
      %p127 = scmp.lt.s32.totalorder %s12, 4
      // Predicated region
      $region21: #{tpu_custom_call.1} parent=5 // pred_check
        %p128 = pneg %p127
      $region22: #{tpu_custom_call.1} parent=5 // pred_check_branch
        %130 = sbr.rel (%p128) target = $region24
      $region23: #{tpu_custom_call.1} parent=5 // pred_region
        // Predicated region
        $region25: #{tpu_custom_call.1} parent=23 // pred_check
          %p131 = pneg %p32
        $region26: #{tpu_custom_call.1} parent=23 // pred_check_branch
          %133 = sbr.rel (%p131) target = $region28
        $region27: #{tpu_custom_call.1} parent=23 // pred_region
          %s134 = smul.u32 64, %s12
          %p135 = scmp.lt.s32.totalorder %s134, 255
          %s136 = scalar_select %p135, %s134, 255
          %s137 = smul.addr %s136, 8
          %s138 = scalar_lea.vmem %s0, %s137
          %s139 = smul.u32 64, %s12
        $region28: #{tpu_custom_call.1} parent=23 // pred_fallthru
          _
      $region24: #{tpu_custom_call.1} parent=5 // pred_fallthru
        _
      %p140 = scmp.le.s32.totalorder 1, %s12
      %p141 = scmp.lt.s32.totalorder %s12, 5
      %p142 = pnand %p140, %p141
      %p143 = pneg %p142
      // Predicated region
      $region29: #{tpu_custom_call.1} parent=5 // pred_check
        _
      $region30: #{tpu_custom_call.1} parent=5 // pred_check_branch
        %145 = sbr.rel (%p142) target = $region32
      $region31: #{tpu_custom_call.1} parent=5 // pred_region
        %s146 = ssub.s32 %s12, 1
        %s147 = smul.u32 64, %s17
        %p148 = scmp.lt.s32.totalorder %s147, 255
        %s149 = scalar_select %p148, %s147, 255
        %s150 = smul.addr %s149, 8
        %s151 = scalar_lea.vmem %s0, %s150
        %p152 = pneg %p38
        %p153 = pneg %p35
        %p154 = pneg %p59
        %p155 = pneg %p56
        %p156 = pneg %p80
        %p157 = pneg %p77
        %p158 = pneg %p106
        %p159 = pneg %p103
        %s160 = sand.u32 %s93, 1
        %s161 = scalar_lea.sflag [#allocation3], %s160
        %s162 = sand.u32 %s93, 1
        %s163 = smul.addr %s162, 256
        %s164 = scalar_lea.vmem [#allocation2], %s163
        %s165 = smul.u32 64, %s17
        %p166 = scmp.lt.s32.totalorder %s165, 255
        %s167 = scalar_select %p166, %s165, 255
        %s168 = smul.addr %s167, 8
        %s169 = scalar_lea.vmem %s0, %s168
        %s170 = smul.u32 64, %s17
        %s171 = smul.u32 64, %s17
        %v173 = vld [vmem:[%s169] sm:$0xff]
        %v174 = vld [vmem:[%s169 + $0x8] sm:$0xff]
        %v175 = vld [vmem:[%s169 + $0x10] sm:$0xff]
        %v176 = vld [vmem:[%s169 + $0x18] sm:$0xff]
        %v177 = vld [vmem:[%s169 + $0x20] sm:$0xff]
        %v178 = vld [vmem:[%s169 + $0x28] sm:$0xff]
        %v179 = vld [vmem:[%s169 + $0x30] sm:$0xff]
        %v180 = vld [vmem:[%s169 + $0x38] sm:$0xff]
        %v181 = vld [vmem:[%s169 + $0x40] sm:$0xff]
        %v182 = vld [vmem:[%s169 + $0x48] sm:$0xff]
        %v183 = vld [vmem:[%s169 + $0x50] sm:$0xff]
        %v184 = vld [vmem:[%s169 + $0x58] sm:$0xff]
        %v185 = vld [vmem:[%s169 + $0x60] sm:$0xff]
        %v186 = vld [vmem:[%s169 + $0x68] sm:$0xff]
        %v187 = vld [vmem:[%s169 + $0x70] sm:$0xff]
        %v188 = vld [vmem:[%s169 + $0x78] sm:$0xff]
        %v189 = vld [vmem:[%s169 + $0x80] sm:$0xff]
        %v190 = vld [vmem:[%s169 + $0x88] sm:$0xff]
        %v191 = vld [vmem:[%s169 + $0x90] sm:$0xff]
        %v192 = vld [vmem:[%s169 + $0x98] sm:$0xff]
        %v193 = vld [vmem:[%s169 + $0xa0] sm:$0xff]
        %v194 = vld [vmem:[%s169 + $0xa8] sm:$0xff]
        %v195 = vld [vmem:[%s169 + $0xb0] sm:$0xff]
        %v196 = vld [vmem:[%s169 + $0xb8] sm:$0xff]
        %v197 = vld [vmem:[%s169 + $0xc0] sm:$0xff]
        %v198 = vld [vmem:[%s169 + $0xc8] sm:$0xff]
        %v199 = vld [vmem:[%s169 + $0xd0] sm:$0xff]
        %v200 = vld [vmem:[%s169 + $0xd8] sm:$0xff]
        %v201 = vld [vmem:[%s169 + $0xe0] sm:$0xff]
        %v202 = vld [vmem:[%s169 + $0xe8] sm:$0xff]
        %v203 = vld [vmem:[%s169 + $0xf0] sm:$0xff]
        %v204 = vld [vmem:[%s169 + $0xf8] sm:$0xff]
        %v205 = vld [vmem:[%s169 + $0x100] sm:$0xff]
        %v206 = vld [vmem:[%s169 + $0x108] sm:$0xff]
        %v207 = vld [vmem:[%s169 + $0x110] sm:$0xff]
        %v208 = vld [vmem:[%s169 + $0x118] sm:$0xff]
        %v209 = vld [vmem:[%s169 + $0x120] sm:$0xff]
        %v210 = vld [vmem:[%s169 + $0x128] sm:$0xff]
        %v211 = vld [vmem:[%s169 + $0x130] sm:$0xff]
        %v212 = vld [vmem:[%s169 + $0x138] sm:$0xff]
        %v213 = vld [vmem:[%s169 + $0x140] sm:$0xff]
        %v214 = vld [vmem:[%s169 + $0x148] sm:$0xff]
        %v215 = vld [vmem:[%s169 + $0x150] sm:$0xff]
        %v216 = vld [vmem:[%s169 + $0x158] sm:$0xff]
        %v217 = vld [vmem:[%s169 + $0x160] sm:$0xff]
        %v218 = vld [vmem:[%s169 + $0x168] sm:$0xff]
        %v219 = vld [vmem:[%s169 + $0x170] sm:$0xff]
        %v220 = vld [vmem:[%s169 + $0x178] sm:$0xff]
        %v221 = vld [vmem:[%s169 + $0x180] sm:$0xff]
        %v222 = vld [vmem:[%s169 + $0x188] sm:$0xff]
        %v223 = vld [vmem:[%s169 + $0x190] sm:$0xff]
        %v224 = vld [vmem:[%s169 + $0x198] sm:$0xff]
        %v225 = vld [vmem:[%s169 + $0x1a0] sm:$0xff]
        %v226 = vld [vmem:[%s169 + $0x1a8] sm:$0xff]
        %v227 = vld [vmem:[%s169 + $0x1b0] sm:$0xff]
        %v228 = vld [vmem:[%s169 + $0x1b8] sm:$0xff]
        %v229 = vld [vmem:[%s169 + $0x1c0] sm:$0xff]
        %v230 = vld [vmem:[%s169 + $0x1c8] sm:$0xff]
        %v231 = vld [vmem:[%s169 + $0x1d0] sm:$0xff]
        %v232 = vld [vmem:[%s169 + $0x1d8] sm:$0xff]
        %v233 = vld [vmem:[%s169 + $0x1e0] sm:$0xff]
        %v234 = vld [vmem:[%s169 + $0x1e8] sm:$0xff]
        %v235 = vld [vmem:[%s169 + $0x1f0] sm:$0xff]
        %v236 = vld [vmem:[%s169 + $0x1f8] sm:$0xff]
        %v237 = vpack.c.bf16 %v174, %v173
        %v238 = vpack.c.bf16 %v176, %v175
        %v239 = vpack.c.bf16 %v178, %v177
        %v240 = vpack.c.bf16 %v180, %v179
        %v241 = vpack.c.bf16 %v182, %v181
        %v242 = vpack.c.bf16 %v184, %v183
        %v243 = vpack.c.bf16 %v186, %v185
        %v244 = vpack.c.bf16 %v188, %v187
        %v245 = vpack.c.bf16 %v190, %v189
        %v246 = vpack.c.bf16 %v192, %v191
        %v247 = vpack.c.bf16 %v194, %v193
        %v248 = vpack.c.bf16 %v196, %v195
        %v249 = vpack.c.bf16 %v198, %v197
        %v250 = vpack.c.bf16 %v200, %v199
        %v251 = vpack.c.bf16 %v202, %v201
        %v252 = vpack.c.bf16 %v204, %v203
        %v253 = vpack.c.bf16 %v206, %v205
        %v254 = vpack.c.bf16 %v208, %v207
        %v255 = vpack.c.bf16 %v210, %v209
        %v256 = vpack.c.bf16 %v212, %v211
        %v257 = vpack.c.bf16 %v214, %v213
        %v258 = vpack.c.bf16 %v216, %v215
        %v259 = vpack.c.bf16 %v218, %v217
        %v260 = vpack.c.bf16 %v220, %v219
        %v261 = vpack.c.bf16 %v222, %v221
        %v262 = vpack.c.bf16 %v224, %v223
        %v263 = vpack.c.bf16 %v226, %v225
        %v264 = vpack.c.bf16 %v228, %v227
        %v265 = vpack.c.bf16 %v230, %v229
        %v266 = vpack.c.bf16 %v232, %v231
        %v267 = vpack.c.bf16 %v234, %v233
        %v268 = vpack.c.bf16 %v236, %v235
        %v269 = vld [vmem:[%s1] sm:$0xf]
        %v270 = vld [vmem:[%s1 + $0x4] sm:$0xf]
        %v271 = vld [vmem:[%s2] sm:$0x1]
        %v273 = vperm.slane %v271, 0
        %v277 = vunpack.c.l.b16 %v269
        %v278 = vunpack.c.l.b16 %v270
        %v279 = vpack.c.b16 %v278, %v277
        %vm281 = vcmask 130048
        %v283 = vsel %vm281, %v237, 0
        %v286 = vsel %vm281, %v238, 0
        %v289 = vsel %vm281, %v239, 0
        %v292 = vsel %vm281, %v240, 0
        %v295 = vsel %vm281, %v241, 0
        %v298 = vsel %vm281, %v242, 0
        %v301 = vsel %vm281, %v243, 0
        %v304 = vsel %vm281, %v244, 0
        %v307 = vsel %vm281, %v245, 0
        %v310 = vsel %vm281, %v246, 0
        %v313 = vsel %vm281, %v247, 0
        %v316 = vsel %vm281, %v248, 0
        %v319 = vsel %vm281, %v249, 0
        %v322 = vsel %vm281, %v250, 0
        %v325 = vsel %vm281, %v251, 0
        %v328 = vsel %vm281, %v252, 0
        %v331 = vsel %vm281, %v253, 0
        %v334 = vsel %vm281, %v254, 0
        %v337 = vsel %vm281, %v255, 0
        %v340 = vsel %vm281, %v256, 0
        %v343 = vsel %vm281, %v257, 0
        %v346 = vsel %vm281, %v258, 0
        %v349 = vsel %vm281, %v259, 0
        %v352 = vsel %vm281, %v260, 0
        %v355 = vsel %vm281, %v261, 0
        %v358 = vsel %vm281, %v262, 0
        %v361 = vsel %vm281, %v263, 0
        %v364 = vsel %vm281, %v264, 0
        %v367 = vsel %vm281, %v265, 0
        %v370 = vsel %vm281, %v266, 0
        %v373 = vsel %vm281, %v267, 0
        %v376 = vsel %vm281, %v268, 0
        %378 = vmatpush.bf16.msra.mxu0 0
        %379 = vmatpush.bf16.msra.mxu0 0
        %380 = vmatpush.bf16.msra.mxu0 0
        %381 = vmatpush.bf16.msra.mxu0 0
        %382 = vmatpush.bf16.msra.mxu0 0
        %383 = vmatpush.bf16.msra.mxu0 0
        %384 = vmatpush.bf16.msra.mxu0 0
        %385 = vmatpush.bf16.msra.mxu0 %v279
        %386 = vmatmul.bf16.gmra.mxu0 %v283
        %v387 = vpop.f32.mrf.mxu0
        %v388 = vadd.f32 %v273, %v387
        %v389 = vpop.f32.mrf.mxu0
        %v390 = vadd.f32 %v273, %v389
        %391 = vmatmul.bf16.gmra.mxu0 %v286
        %v392 = vpop.f32.mrf.mxu0
        %v393 = vadd.f32 %v273, %v392
        %v394 = vpop.f32.mrf.mxu0
        %v395 = vadd.f32 %v273, %v394
        %396 = vmatmul.bf16.gmra.mxu0 %v289
        %v397 = vpop.f32.mrf.mxu0
        %v398 = vadd.f32 %v273, %v397
        %v399 = vpop.f32.mrf.mxu0
        %v400 = vadd.f32 %v273, %v399
        %401 = vmatmul.bf16.gmra.mxu0 %v292
        %v402 = vpop.f32.mrf.mxu0
        %v403 = vadd.f32 %v273, %v402
        %v404 = vpop.f32.mrf.mxu0
        %v405 = vadd.f32 %v273, %v404
        %406 = vmatmul.bf16.gmra.mxu0 %v295
        %v407 = vpop.f32.mrf.mxu0
        %v408 = vadd.f32 %v273, %v407
        %v409 = vpop.f32.mrf.mxu0
        %v410 = vadd.f32 %v273, %v409
        %411 = vmatmul.bf16.gmra.mxu0 %v298
        %v412 = vpop.f32.mrf.mxu0
        %v413 = vadd.f32 %v273, %v412
        %v414 = vpop.f32.mrf.mxu0
        %v415 = vadd.f32 %v273, %v414
        %416 = vmatmul.bf16.gmra.mxu0 %v301
        %v417 = vpop.f32.mrf.mxu0
        %v418 = vadd.f32 %v273, %v417
        %v419 = vpop.f32.mrf.mxu0
        %v420 = vadd.f32 %v273, %v419
        %421 = vmatmul.bf16.gmra.mxu0 %v304
        %v422 = vpop.f32.mrf.mxu0
        %v423 = vadd.f32 %v273, %v422
        %v424 = vpop.f32.mrf.mxu0
        %v425 = vadd.f32 %v273, %v424
        %426 = vmatmul.bf16.gmra.mxu0 %v307
        %v427 = vpop.f32.mrf.mxu0
        %v428 = vadd.f32 %v273, %v427
        %v429 = vpop.f32.mrf.mxu0
        %v430 = vadd.f32 %v273, %v429
        %431 = vmatmul.bf16.gmra.mxu0 %v310
        %v432 = vpop.f32.mrf.mxu0
        %v433 = vadd.f32 %v273, %v432
        %v434 = vpop.f32.mrf.mxu0
        %v435 = vadd.f32 %v273, %v434
        %436 = vmatmul.bf16.gmra.mxu0 %v313
        %v437 = vpop.f32.mrf.mxu0
        %v438 = vadd.f32 %v273, %v437
        %v439 = vpop.f32.mrf.mxu0
        %v440 = vadd.f32 %v273, %v439
        %441 = vmatmul.bf16.gmra.mxu0 %v316
        %v442 = vpop.f32.mrf.mxu0
        %v443 = vadd.f32 %v273, %v442
        %v444 = vpop.f32.mrf.mxu0
        %v445 = vadd.f32 %v273, %v444
        %446 = vmatmul.bf16.gmra.mxu0 %v319
        %v447 = vpop.f32.mrf.mxu0
        %v448 = vadd.f32 %v273, %v447
        %v449 = vpop.f32.mrf.mxu0
        %v450 = vadd.f32 %v273, %v449
        %451 = vmatmul.bf16.gmra.mxu0 %v322
        %v452 = vpop.f32.mrf.mxu0
        %v453 = vadd.f32 %v273, %v452
        %v454 = vpop.f32.mrf.mxu0
        %v455 = vadd.f32 %v273, %v454
        %456 = vmatmul.bf16.gmra.mxu0 %v325
        %v457 = vpop.f32.mrf.mxu0
        %v458 = vadd.f32 %v273, %v457
        %v459 = vpop.f32.mrf.mxu0
        %v460 = vadd.f32 %v273, %v459
        %461 = vmatmul.bf16.gmra.mxu0 %v328
        %v462 = vpop.f32.mrf.mxu0
        %v463 = vadd.f32 %v273, %v462
        %v464 = vpop.f32.mrf.mxu0
        %v465 = vadd.f32 %v273, %v464
        %466 = vmatmul.bf16.gmra.mxu0 %v331
        %v467 = vpop.f32.mrf.mxu0
        %v468 = vadd.f32 %v273, %v467
        %v469 = vpop.f32.mrf.mxu0
        %v470 = vadd.f32 %v273, %v469
        %471 = vmatmul.bf16.gmra.mxu0 %v334
        %v472 = vpop.f32.mrf.mxu0
        %v473 = vadd.f32 %v273, %v472
        %v474 = vpop.f32.mrf.mxu0
        %v475 = vadd.f32 %v273, %v474
        %476 = vmatmul.bf16.gmra.mxu0 %v337
        %v477 = vpop.f32.mrf.mxu0
        %v478 = vadd.f32 %v273, %v477
        %v479 = vpop.f32.mrf.mxu0
        %v480 = vadd.f32 %v273, %v479
        %481 = vmatmul.bf16.gmra.mxu0 %v340
        %v482 = vpop.f32.mrf.mxu0
        %v483 = vadd.f32 %v273, %v482
        %v484 = vpop.f32.mrf.mxu0
        %v485 = vadd.f32 %v273, %v484
        %486 = vmatmul.bf16.gmra.mxu0 %v343
        %v487 = vpop.f32.mrf.mxu0
        %v488 = vadd.f32 %v273, %v487
        %v489 = vpop.f32.mrf.mxu0
        %v490 = vadd.f32 %v273, %v489
        %491 = vmatmul.bf16.gmra.mxu0 %v346
        %v492 = vpop.f32.mrf.mxu0
        %v493 = vadd.f32 %v273, %v492
        %v494 = vpop.f32.mrf.mxu0
        %v495 = vadd.f32 %v273, %v494
        %496 = vmatmul.bf16.gmra.mxu0 %v349
        %v497 = vpop.f32.mrf.mxu0
        %v498 = vadd.f32 %v273, %v497
        %v499 = vpop.f32.mrf.mxu0
        %v500 = vadd.f32 %v273, %v499
        %501 = vmatmul.bf16.gmra.mxu0 %v352
        %v502 = vpop.f32.mrf.mxu0
        %v503 = vadd.f32 %v273, %v502
        %v504 = vpop.f32.mrf.mxu0
        %v505 = vadd.f32 %v273, %v504
        %506 = vmatmul.bf16.gmra.mxu0 %v355
        %v507 = vpop.f32.mrf.mxu0
        %v508 = vadd.f32 %v273, %v507
        %v509 = vpop.f32.mrf.mxu0
        %v510 = vadd.f32 %v273, %v509
        %511 = vmatmul.bf16.gmra.mxu0 %v358
        %v512 = vpop.f32.mrf.mxu0
        %v513 = vadd.f32 %v273, %v512
        %v514 = vpop.f32.mrf.mxu0
        %v515 = vadd.f32 %v273, %v514
        %516 = vmatmul.bf16.gmra.mxu0 %v361
        %v517 = vpop.f32.mrf.mxu0
        %v518 = vadd.f32 %v273, %v517
        %v519 = vpop.f32.mrf.mxu0
        %v520 = vadd.f32 %v273, %v519
        %521 = vmatmul.bf16.gmra.mxu0 %v364
        %v522 = vpop.f32.mrf.mxu0
        %v523 = vadd.f32 %v273, %v522
        %v524 = vpop.f32.mrf.mxu0
        %v525 = vadd.f32 %v273, %v524
        %526 = vmatmul.bf16.gmra.mxu0 %v367
        %v527 = vpop.f32.mrf.mxu0
        %v528 = vadd.f32 %v273, %v527
        %v529 = vpop.f32.mrf.mxu0
        %v530 = vadd.f32 %v273, %v529
        %531 = vmatmul.bf16.gmra.mxu0 %v370
        %v532 = vpop.f32.mrf.mxu0
        %v533 = vadd.f32 %v273, %v532
        %v534 = vpop.f32.mrf.mxu0
        %v535 = vadd.f32 %v273, %v534
        %536 = vmatmul.bf16.gmra.mxu0 %v373
        %v537 = vpop.f32.mrf.mxu0
        %v538 = vadd.f32 %v273, %v537
        %v539 = vpop.f32.mrf.mxu0
        %v540 = vadd.f32 %v273, %v539
        %541 = vmatmul.bf16.gmra.mxu0 %v376
        %v542 = vpop.f32.mrf.mxu0
        %v543 = vadd.f32 %v273, %v542
        %v544 = vpop.f32.mrf.mxu0
        %v545 = vadd.f32 %v273, %v544
        %546 = vdwg.mxu0
        %v547 = vmax.f32 %v388, 0.0
        %v548 = vmax.f32 %v390, 0.0
        %v549 = vmax.f32 %v393, 0.0
        %v550 = vmax.f32 %v395, 0.0
        %v551 = vmax.f32 %v398, 0.0
        %v552 = vmax.f32 %v400, 0.0
        %v553 = vmax.f32 %v403, 0.0
        %v554 = vmax.f32 %v405, 0.0
        %v555 = vmax.f32 %v408, 0.0
        %v556 = vmax.f32 %v410, 0.0
        %v557 = vmax.f32 %v413, 0.0
        %v558 = vmax.f32 %v415, 0.0
        %v559 = vmax.f32 %v418, 0.0
        %v560 = vmax.f32 %v420, 0.0
        %v561 = vmax.f32 %v423, 0.0
        %v562 = vmax.f32 %v425, 0.0
        %v563 = vmax.f32 %v428, 0.0
        %v564 = vmax.f32 %v430, 0.0
        %v565 = vmax.f32 %v433, 0.0
        %v566 = vmax.f32 %v435, 0.0
        %v567 = vmax.f32 %v438, 0.0
        %v568 = vmax.f32 %v440, 0.0
        %v569 = vmax.f32 %v443, 0.0
        %v570 = vmax.f32 %v445, 0.0
        %v571 = vmax.f32 %v448, 0.0
        %v572 = vmax.f32 %v450, 0.0
        %v573 = vmax.f32 %v453, 0.0
        %v574 = vmax.f32 %v455, 0.0
        %v575 = vmax.f32 %v458, 0.0
        %v576 = vmax.f32 %v460, 0.0
        %v577 = vmax.f32 %v463, 0.0
        %v578 = vmax.f32 %v465, 0.0
        %v579 = vmax.f32 %v468, 0.0
        %v580 = vmax.f32 %v470, 0.0
        %v581 = vmax.f32 %v473, 0.0
        %v582 = vmax.f32 %v475, 0.0
        %v583 = vmax.f32 %v478, 0.0
        %v584 = vmax.f32 %v480, 0.0
        %v585 = vmax.f32 %v483, 0.0
        %v586 = vmax.f32 %v485, 0.0
        %v587 = vmax.f32 %v488, 0.0
        %v588 = vmax.f32 %v490, 0.0
        %v589 = vmax.f32 %v493, 0.0
        %v590 = vmax.f32 %v495, 0.0
        %v591 = vmax.f32 %v498, 0.0
        %v592 = vmax.f32 %v500, 0.0
        %v593 = vmax.f32 %v503, 0.0
        %v594 = vmax.f32 %v505, 0.0
        %v595 = vmax.f32 %v508, 0.0
        %v596 = vmax.f32 %v510, 0.0
        %v597 = vmax.f32 %v513, 0.0
        %v598 = vmax.f32 %v515, 0.0
        %v599 = vmax.f32 %v518, 0.0
        %v600 = vmax.f32 %v520, 0.0
        %v601 = vmax.f32 %v523, 0.0
        %v602 = vmax.f32 %v525, 0.0
        %v603 = vmax.f32 %v528, 0.0
        %v604 = vmax.f32 %v530, 0.0
        %v605 = vmax.f32 %v533, 0.0
        %v606 = vmax.f32 %v535, 0.0
        %v607 = vmax.f32 %v538, 0.0
        %v608 = vmax.f32 %v540, 0.0
        %v609 = vmax.f32 %v543, 0.0
        %v610 = vmax.f32 %v545, 0.0
        %v611 = vpack.c.bf16 %v547, %v547
        %v612 = vpack.c.bf16 %v548, %v548
        %v613 = vpack.c.bf16 %v549, %v549
        %v614 = vpack.c.bf16 %v550, %v550
        %v615 = vpack.c.bf16 %v551, %v551
        %v616 = vpack.c.bf16 %v552, %v552
        %v617 = vpack.c.bf16 %v553, %v553
        %v618 = vpack.c.bf16 %v554, %v554
        %v619 = vpack.c.bf16 %v555, %v555
        %v620 = vpack.c.bf16 %v556, %v556
        %v621 = vpack.c.bf16 %v557, %v557
        %v622 = vpack.c.bf16 %v558, %v558
        %v623 = vpack.c.bf16 %v559, %v559
        %v624 = vpack.c.bf16 %v560, %v560
        %v625 = vpack.c.bf16 %v561, %v561
        %v626 = vpack.c.bf16 %v562, %v562
        %v627 = vpack.c.bf16 %v563, %v563
        %v628 = vpack.c.bf16 %v564, %v564
        %v629 = vpack.c.bf16 %v565, %v565
        %v630 = vpack.c.bf16 %v566, %v566
        %v631 = vpack.c.bf16 %v567, %v567
        %v632 = vpack.c.bf16 %v568, %v568
        %v633 = vpack.c.bf16 %v569, %v569
        %v634 = vpack.c.bf16 %v570, %v570
        %v635 = vpack.c.bf16 %v571, %v571
        %v636 = vpack.c.bf16 %v572, %v572
        %v637 = vpack.c.bf16 %v573, %v573
        %v638 = vpack.c.bf16 %v574, %v574
        %v639 = vpack.c.bf16 %v575, %v575
        %v640 = vpack.c.bf16 %v576, %v576
        %v641 = vpack.c.bf16 %v577, %v577
        %v642 = vpack.c.bf16 %v578, %v578
        %v643 = vpack.c.bf16 %v579, %v579
        %v644 = vpack.c.bf16 %v580, %v580
        %v645 = vpack.c.bf16 %v581, %v581
        %v646 = vpack.c.bf16 %v582, %v582
        %v647 = vpack.c.bf16 %v583, %v583
        %v648 = vpack.c.bf16 %v584, %v584
        %v649 = vpack.c.bf16 %v585, %v585
        %v650 = vpack.c.bf16 %v586, %v586
        %v651 = vpack.c.bf16 %v587, %v587
        %v652 = vpack.c.bf16 %v588, %v588
        %v653 = vpack.c.bf16 %v589, %v589
        %v654 = vpack.c.bf16 %v590, %v590
        %v655 = vpack.c.bf16 %v591, %v591
        %v656 = vpack.c.bf16 %v592, %v592
        %v657 = vpack.c.bf16 %v593, %v593
        %v658 = vpack.c.bf16 %v594, %v594
        %v659 = vpack.c.bf16 %v595, %v595
        %v660 = vpack.c.bf16 %v596, %v596
        %v661 = vpack.c.bf16 %v597, %v597
        %v662 = vpack.c.bf16 %v598, %v598
        %v663 = vpack.c.bf16 %v599, %v599
        %v664 = vpack.c.bf16 %v600, %v600
        %v665 = vpack.c.bf16 %v601, %v601
        %v666 = vpack.c.bf16 %v602, %v602
        %v667 = vpack.c.bf16 %v603, %v603
        %v668 = vpack.c.bf16 %v604, %v604
        %v669 = vpack.c.bf16 %v605, %v605
        %v670 = vpack.c.bf16 %v606, %v606
        %v671 = vpack.c.bf16 %v607, %v607
        %v672 = vpack.c.bf16 %v608, %v608
        %v673 = vpack.c.bf16 %v609, %v609
        %v674 = vpack.c.bf16 %v610, %v610
        %675 = vst [vmem:[%s164] sm:$0xf] %v611
        %676 = vst [vmem:[%s164 + $0x4] sm:$0xf] %v612
        %677 = vst [vmem:[%s164 + $0x8] sm:$0xf] %v613
        %678 = vst [vmem:[%s164 + $0xc] sm:$0xf] %v614
        %679 = vst [vmem:[%s164 + $0x10] sm:$0xf] %v615
        %680 = vst [vmem:[%s164 + $0x14] sm:$0xf] %v616
        %681 = vst [vmem:[%s164 + $0x18] sm:$0xf] %v617
        %682 = vst [vmem:[%s164 + $0x1c] sm:$0xf] %v618
        %683 = vst [vmem:[%s164 + $0x20] sm:$0xf] %v619
        %684 = vst [vmem:[%s164 + $0x24] sm:$0xf] %v620
        %685 = vst [vmem:[%s164 + $0x28] sm:$0xf] %v621
        %686 = vst [vmem:[%s164 + $0x2c] sm:$0xf] %v622
        %687 = vst [vmem:[%s164 + $0x30] sm:$0xf] %v623
        %688 = vst [vmem:[%s164 + $0x34] sm:$0xf] %v624
        %689 = vst [vmem:[%s164 + $0x38] sm:$0xf] %v625
        %690 = vst [vmem:[%s164 + $0x3c] sm:$0xf] %v626
        %691 = vst [vmem:[%s164 + $0x40] sm:$0xf] %v627
        %692 = vst [vmem:[%s164 + $0x44] sm:$0xf] %v628
        %693 = vst [vmem:[%s164 + $0x48] sm:$0xf] %v629
        %694 = vst [vmem:[%s164 + $0x4c] sm:$0xf] %v630
        %695 = vst [vmem:[%s164 + $0x50] sm:$0xf] %v631
        %696 = vst [vmem:[%s164 + $0x54] sm:$0xf] %v632
        %697 = vst [vmem:[%s164 + $0x58] sm:$0xf] %v633
        %698 = vst [vmem:[%s164 + $0x5c] sm:$0xf] %v634
        %699 = vst [vmem:[%s164 + $0x60] sm:$0xf] %v635
        %700 = vst [vmem:[%s164 + $0x64] sm:$0xf] %v636
        %701 = vst [vmem:[%s164 + $0x68] sm:$0xf] %v637
        %702 = vst [vmem:[%s164 + $0x6c] sm:$0xf] %v638
        %703 = vst [vmem:[%s164 + $0x70] sm:$0xf] %v639
        %704 = vst [vmem:[%s164 + $0x74] sm:$0xf] %v640
        %705 = vst [vmem:[%s164 + $0x78] sm:$0xf] %v641
        %706 = vst [vmem:[%s164 + $0x7c] sm:$0xf] %v642
        %707 = vst [vmem:[%s164 + $0x80] sm:$0xf] %v643
        %708 = vst [vmem:[%s164 + $0x84] sm:$0xf] %v644
        %709 = vst [vmem:[%s164 + $0x88] sm:$0xf] %v645
        %710 = vst [vmem:[%s164 + $0x8c] sm:$0xf] %v646
        %711 = vst [vmem:[%s164 + $0x90] sm:$0xf] %v647
        %712 = vst [vmem:[%s164 + $0x94] sm:$0xf] %v648
        %713 = vst [vmem:[%s164 + $0x98] sm:$0xf] %v649
        %714 = vst [vmem:[%s164 + $0x9c] sm:$0xf] %v650
        %715 = vst [vmem:[%s164 + $0xa0] sm:$0xf] %v651
        %716 = vst [vmem:[%s164 + $0xa4] sm:$0xf] %v652
        %717 = vst [vmem:[%s164 + $0xa8] sm:$0xf] %v653
        %718 = vst [vmem:[%s164 + $0xac] sm:$0xf] %v654
        %719 = vst [vmem:[%s164 + $0xb0] sm:$0xf] %v655
        %720 = vst [vmem:[%s164 + $0xb4] sm:$0xf] %v656
        %721 = vst [vmem:[%s164 + $0xb8] sm:$0xf] %v657
        %722 = vst [vmem:[%s164 + $0xbc] sm:$0xf] %v658
        %723 = vst [vmem:[%s164 + $0xc0] sm:$0xf] %v659
        %724 = vst [vmem:[%s164 + $0xc4] sm:$0xf] %v660
        %725 = vst [vmem:[%s164 + $0xc8] sm:$0xf] %v661
        %726 = vst [vmem:[%s164 + $0xcc] sm:$0xf] %v662
        %727 = vst [vmem:[%s164 + $0xd0] sm:$0xf] %v663
        %728 = vst [vmem:[%s164 + $0xd4] sm:$0xf] %v664
        %729 = vst [vmem:[%s164 + $0xd8] sm:$0xf] %v665
        %730 = vst [vmem:[%s164 + $0xdc] sm:$0xf] %v666
        %731 = vst [vmem:[%s164 + $0xe0] sm:$0xf] %v667
        %732 = vst [vmem:[%s164 + $0xe4] sm:$0xf] %v668
        %733 = vst [vmem:[%s164 + $0xe8] sm:$0xf] %v669
        %734 = vst [vmem:[%s164 + $0xec] sm:$0xf] %v670
        %735 = vst [vmem:[%s164 + $0xf0] sm:$0xf] %v671
        %736 = vst [vmem:[%s164 + $0xf4] sm:$0xf] %v672
        %737 = vst [vmem:[%s164 + $0xf8] sm:$0xf] %v673
        %738 = vst [vmem:[%s164 + $0xfc] sm:$0xf] %v674
        %s739 = sand.u32 %s93, 1
        %s740 = scalar_lea.sflag [#allocation3], %s739
        %s741 = sand.u32 %s93, 1
        %s742 = smul.addr %s741, 256
        %s743 = scalar_lea.vmem [#allocation2], %s742
        // Predicated region
        $region33: #{tpu_custom_call.1} parent=31 // pred_check
          %p744 = pneg %p103
        $region34: #{tpu_custom_call.1} parent=31 // pred_check_branch
          %746 = sbr.rel (%p744) target = $region36
        $region35: #{tpu_custom_call.1} parent=31 // pred_region
          %s747 = smul.u32 64, %s17
          %749 = vsyncadd %s740, 0
          %s750 = smul.addr %s747, 4
          %s751 = scalar_lea.hbm %s3, %s750
          %s752 = sshll.u32 %s743, 4
          %s753 = int_to_ptr.vmem [resolvable:$true] %s752
          %s754 = sshll.u32 %s751, 4
          %s755 = int_to_ptr.hbm [resolvable:$true] %s754
          %760 = dma.vmem_to_hbm [thread:$0]  %s753, 4096, %s755, %s740, 64, 64, 4
        $region36: #{tpu_custom_call.1} parent=31 // pred_fallthru
          _
      $region32: #{tpu_custom_call.1} parent=5 // pred_fallthru
        _
      %p761 = scmp.le.s32.totalorder 2, %s12
      // Predicated region
      $region37: #{tpu_custom_call.1} parent=5 // pred_check
        %p762 = pneg %p761
      $region38: #{tpu_custom_call.1} parent=5 // pred_check_branch
        %764 = sbr.rel (%p762) target = $region40
      $region39: #{tpu_custom_call.1} parent=5 // pred_region
        %s765 = ssub.s32 %s12, 2
        // Predicated region
        $region41: #{tpu_custom_call.1} parent=39 // pred_check
          %p766 = pneg %p109
        $region42: #{tpu_custom_call.1} parent=39 // pred_check_branch
          %768 = sbr.rel (%p766) target = $region44
        $region43: #{tpu_custom_call.1} parent=39 // pred_region
          %s769 = sand.u32 %s94, 1
          %s770 = scalar_lea.sflag [#allocation3], %s769
          %s771 = sand.u32 %s94, 1
          %s772 = smul.addr %s771, 256
          %s773 = scalar_lea.vmem [#allocation2], %s772
          %775 = dma.done %s770, 4096
        $region44: #{tpu_custom_call.1} parent=39 // pred_fallthru
          _
      $region40: #{tpu_custom_call.1} parent=5 // pred_fallthru
        _
    $region6: #{tpu_custom_call.1} parent=1 // loop_footer
      %s16 = sadd.s32 1, %s12
    $region7: #{tpu_custom_call.1} parent=1 // loop_footer_branch
      %11 = sbr.rel target = $region3
    $region8: #{tpu_custom_call.1} parent=1 // loop_exit
      _
    %776 = vsyncpa [#allocation3], 1
    %s777 = scalar_lea.sflag [#allocation3], 1
    %778 = vsyncpa %s777, 1

</llo_original>
